<compile_context>
chip_gen: v5e
topology: v5e:2x2
jax: 0.10.0
libtpu: 0.0.40
codegen_flags: <defaults>
</compile_context>

<pallas_src>
import functools

import jax
import jax.numpy as jnp
from jax import lax
from jax.experimental import pallas as pl
from jax.experimental.pallas import tpu as pltpu

# ---- model config (small, consistent with the module) ----
BATCH = 2
SEQ = 8              # input_ids.size(1)  (power of two -> in-kernel AND for pos ids)
HIDDEN = 32          # args.hidden_size
ITEM_SIZE = 64       # args.item_size (row 0 == padding_idx -> zero row)
MAX_SEQ = 16         # args.max_seq_length (>= SEQ)
LN_EPS = 1e-12


def embeddings_kernel(ids_ref, table_ref, o_ref, *, eps, item_size, seq, gb_row):
    # ids_ref:   (B*S, 1) int32 — raw item ids, row-major over (batch, seq)
    # table_ref: (128, H) f32   — [item table | pos table | gamma | beta | zero pad]
    # o_ref:     (B*S, H) f32
    bs = o_ref.shape[0]
    vt = table_ref.shape[0]

    item_id = ids_ref[:, 0:1]                                   # (BS, 1)

    # Position ids derived from the flat row index: pos = row mod SEQ.
    row = lax.broadcasted_iota(jnp.int32, (bs, 1), 0)           # (BS, 1)
    if (seq & (seq - 1)) == 0:
        pos_in_seq = row & (seq - 1)                            # single VPU AND
    else:
        pos_in_seq = lax.rem(row, seq)
    pos_id = item_size + pos_in_seq                             # offset into packed table

    # "Two-hot" selector: item row OR (offset) position row.  The two id
    # ranges are disjoint, so OR is exact; gamma/beta/pad rows are never hit.
    lane = lax.broadcasted_iota(jnp.int32, (bs, vt), 1)         # (BS, 128)
    sel = ((lane == item_id) | (lane == pos_id)).astype(jnp.float32)
    emb = jnp.dot(sel, table_ref[...],
                  preferred_element_type=jnp.float32)           # (BS, H)

    # --- LayerNorm (TF style: eps inside the sqrt), one-pass variance so the
    # two lane reductions are independent on the XLU critical path. ---
    mean = jnp.mean(emb, axis=-1, keepdims=True)
    mean_sq = jnp.mean(emb * emb, axis=-1, keepdims=True)
    var = mean_sq - mean * mean
    xn = (emb - mean) * lax.rsqrt(var + eps)

    gamma = table_ref[gb_row:gb_row + 1, :]                     # (1, H)
    beta = table_ref[gb_row + 1:gb_row + 2, :]                  # (1, H)

    # self.dropout is identity in eval/inference mode.
    o_ref[...] = (gamma * xn + beta).astype(o_ref.dtype)


def pack_embedding_params(item_table, pos_table, gamma, beta, *, pad_rows=128):
    """Pack [item table | pos table | gamma | beta | zero pad] once at init time.

    Returns (table_packed, gb_row) where gb_row is the row index of gamma.
    """
    V, H = item_table.shape
    P = pos_table.shape[0]
    rows = V + P + 2
    padded = max(pad_rows, ((rows + 7) // 8) * 8)
    table_packed = jnp.concatenate(
        [item_table,
         pos_table,
         gamma[None, :],
         beta[None, :],
         jnp.zeros((padded - rows, H), item_table.dtype)],
        axis=0)                                                  # (>=128, H)
    return table_packed, V + P


def embeddings_forward(input_ids, table_packed, gb_row, *, item_size, eps=LN_EPS):
    """Mirrors Embeddings.forward: item_emb(ids) + pos_emb(arange(S)) -> LN -> dropout(eval)."""
    B, S = input_ids.shape
    vt, H = table_packed.shape

    ids = input_ids.astype(jnp.int32).reshape(B * S, 1)          # only wrapper op

    kernel = functools.partial(embeddings_kernel, eps=eps,
                               item_size=item_size, seq=S, gb_row=gb_row)
    out = pl.pallas_call(
        kernel,
        out_shape=jax.ShapeDtypeStruct((B * S, H), jnp.float32),
        grid_spec=pltpu.PrefetchScalarGridSpec(
            num_scalar_prefetch=0,
            grid=(1,),                                           # single invocation
            in_specs=[
                pl.BlockSpec((B * S, 1), lambda i: (0, 0)),      # raw item ids
                pl.BlockSpec((vt, H), lambda i: (0, 0)),         # packed table+LN params
            ],
            out_specs=pl.BlockSpec((B * S, H), lambda i: (0, 0)),
        ),
        compiler_params=pltpu.CompilerParams(
            dimension_semantics=("arbitrary",)),
    )(ids, table_packed)
    return out.reshape(B, S, H)


def reference(input_ids, item_table, pos_table, gamma, beta):
    # Pure-JAX reference mirroring the PyTorch forward (dropout in eval mode).
    B, S = input_ids.shape
    pos_ids = jnp.arange(S)
    emb = item_table[input_ids] + pos_table[pos_ids][None, :, :]
    u = jnp.mean(emb, axis=-1, keepdims=True)
    s = jnp.mean((emb - u) ** 2, axis=-1, keepdims=True)
    xn = (emb - u) / jnp.sqrt(s + LN_EPS)
    return gamma * xn + beta


if __name__ == "__main__":
    key = jax.random.PRNGKey(0)
    k_tab, k_pos, k_ids, k_g, k_b = jax.random.split(key, 5)

    # nn.Embedding(item_size, hidden, padding_idx=0): row 0 is zeros.
    item_table = 0.02 * jax.random.normal(k_tab, (ITEM_SIZE, HIDDEN), jnp.float32)
    item_table = item_table.at[0].set(0.0)
    pos_table = 0.02 * jax.random.normal(k_pos, (MAX_SEQ, HIDDEN), jnp.float32)
    gamma = 1.0 + 0.1 * jax.random.normal(k_g, (HIDDEN,), jnp.float32)
    beta = 0.1 * jax.random.normal(k_b, (HIDDEN,), jnp.float32)

    input_ids = jax.random.randint(k_ids, (BATCH, SEQ), 0, ITEM_SIZE, jnp.int32)
    input_ids = input_ids.at[0, 0].set(0)   # exercise the padding id

    # Parameter packing happens once, outside the per-step hot path.
    table_packed, gb_row = pack_embedding_params(item_table, pos_table, gamma, beta)
    table_packed = jax.block_until_ready(table_packed)

    out = embeddings_forward(input_ids, table_packed, gb_row, item_size=ITEM_SIZE)
    out = jax.block_until_ready(out)

    ref = reference(input_ids, item_table, pos_table, gamma, beta)
    assert out.shape == (BATCH, SEQ, HIDDEN)
    assert jnp.allclose(out, ref, atol=1e-4, rtol=1e-4), "mismatch vs reference"

    print("KERNEL_OK")
</pallas_src>

<mosaic_0001>
module attributes {stable_mosaic.version = 11 : i64} {
  func.func @embeddings_kernel(%arg0: i32, %arg1: memref<16x1xi32, #tpu.memory_space<vmem>>, %arg2: memref<128x32xf32, #tpu.memory_space<vmem>>, %arg3: memref<16x32xf32, #tpu.memory_space<vmem>>) attributes {dimension_semantics = [#tpu.dimension_semantics<arbitrary>], iteration_bounds = array<i64: 1>, scalar_prefetch = 0 : i64, scratch_operands = 0 : i64, tpu.core_type = #tpu.core_type<tc>, window_params = [{pipeline_mode = #tpu.pipeline_mode<synchronous>, transform_indices = @transform_0, window_bounds = array<i64: 16, 1>}, {pipeline_mode = #tpu.pipeline_mode<synchronous>, transform_indices = @transform_1, window_bounds = array<i64: 128, 32>}, {pipeline_mode = #tpu.pipeline_mode<synchronous>, transform_indices = @transform_2, window_bounds = array<i64: 16, 32>}]} {
    %c0 = arith.constant 0 : index
    %c0_0 = arith.constant 0 : index
    %0 = vector.load %arg1[%c0, %c0_0] : memref<16x1xi32, #tpu.memory_space<vmem>>, vector<16x1xi32>
    %1 = tpu.iota {dimensions = array<i32: 0>} : vector<16x1xi32>
    %c7_i32 = arith.constant 7 : i32
    %2 = vector.broadcast %c7_i32 : i32 to vector<16x1xi32>
    %3 = arith.andi %1, %2 : vector<16x1xi32>
    %c64_i32 = arith.constant 64 : i32
    %4 = vector.broadcast %c64_i32 : i32 to vector<16x1xi32>
    %5 = arith.addi %4, %3 : vector<16x1xi32>
    %6 = tpu.iota {dimensions = array<i32: 1>} : vector<16x128xi32>
    %7 = vector.broadcast %0 : vector<16x1xi32> to vector<16x128xi32>
    %8 = arith.cmpi eq, %6, %7 : vector<16x128xi32>
    %9 = vector.broadcast %5 : vector<16x1xi32> to vector<16x128xi32>
    %10 = arith.cmpi eq, %6, %9 : vector<16x128xi32>
    %11 = arith.ori %8, %10 : vector<16x128xi1>
    %12 = arith.extui %11 : vector<16x128xi1> to vector<16x128xi32>
    %13 = arith.sitofp %12 : vector<16x128xi32> to vector<16x128xf32>
    %c0_1 = arith.constant 0 : index
    %c0_2 = arith.constant 0 : index
    %14 = vector.load %arg2[%c0_1, %c0_2] : memref<128x32xf32, #tpu.memory_space<vmem>>, vector<128x32xf32>
    %cst = arith.constant dense<0.000000e+00> : vector<16x32xf32>
    %15 = tpu.matmul %13, %14, %cst {dimension_numbers = #tpu.dot_dimension_numbers<[1], [0], [0], [1], [0, 0, 1, 1], [], []>} : vector<16x128xf32>, vector<128x32xf32>, vector<16x32xf32> -> vector<16x32xf32>
    %cst_3 = arith.constant dense<0.000000e+00> : vector<16xf32>
    %16 = vector.multi_reduction <add>, %15, %cst_3 [1] : vector<16x32xf32> to vector<16xf32>
    %17 = vector.shape_cast %16 : vector<16xf32> to vector<16x1xf32>
    %cst_4 = arith.constant 3.200000e+01 : f32
    %18 = vector.broadcast %cst_4 : f32 to vector<16x1xf32>
    %19 = arith.divf %17, %18 : vector<16x1xf32>
    %20 = arith.mulf %15, %15 : vector<16x32xf32>
    %cst_5 = arith.constant dense<0.000000e+00> : vector<16xf32>
    %21 = vector.multi_reduction <add>, %20, %cst_5 [1] : vector<16x32xf32> to vector<16xf32>
    %22 = vector.shape_cast %21 : vector<16xf32> to vector<16x1xf32>
    %cst_6 = arith.constant 3.200000e+01 : f32
    %23 = vector.broadcast %cst_6 : f32 to vector<16x1xf32>
    %24 = arith.divf %22, %23 : vector<16x1xf32>
    %25 = arith.mulf %19, %19 : vector<16x1xf32>
    %26 = arith.subf %24, %25 : vector<16x1xf32>
    %27 = vector.broadcast %19 : vector<16x1xf32> to vector<16x32xf32>
    %28 = arith.subf %15, %27 : vector<16x32xf32>
    %cst_7 = arith.constant 9.99999996E-13 : f32
    %29 = vector.broadcast %cst_7 : f32 to vector<16x1xf32>
    %30 = arith.addf %26, %29 : vector<16x1xf32>
    %31 = math.rsqrt %30 : vector<16x1xf32>
    %32 = vector.broadcast %31 : vector<16x1xf32> to vector<16x32xf32>
    %33 = arith.mulf %28, %32 : vector<16x32xf32>
    %c80 = arith.constant 80 : index
    %c0_8 = arith.constant 0 : index
    %34 = vector.load %arg2[%c80, %c0_8] : memref<128x32xf32, #tpu.memory_space<vmem>>, vector<1x32xf32>
    %c81 = arith.constant 81 : index
    %c0_9 = arith.constant 0 : index
    %35 = vector.load %arg2[%c81, %c0_9] : memref<128x32xf32, #tpu.memory_space<vmem>>, vector<1x32xf32>
    %36 = vector.broadcast %34 : vector<1x32xf32> to vector<16x32xf32>
    %37 = arith.mulf %36, %33 : vector<16x32xf32>
    %38 = vector.broadcast %35 : vector<1x32xf32> to vector<16x32xf32>
    %39 = arith.addf %37, %38 : vector<16x32xf32>
    %c0_10 = arith.constant 0 : index
    %c0_11 = arith.constant 0 : index
    %40 = vector.load %arg3[%c0_10, %c0_11] : memref<16x32xf32, #tpu.memory_space<vmem>>, vector<16x32xf32>
    tpu.vector_store %arg3[%c0_10, %c0_11], %39 {strides = array<i32>} : memref<16x32xf32, #tpu.memory_space<vmem>>, vector<16x32xf32>,
    return
  }
  func.func @transform_0(%arg0: i32) -> (i32, i32) {
    %c0_i32 = arith.constant 0 : i32
    %c0_i32_0 = arith.constant 0 : i32
    %c0_i32_1 = arith.constant 0 : i32
    return %c0_i32, %c0_i32_0 : i32, i32
  }
  func.func @transform_1(%arg0: i32) -> (i32, i32) {
    %c0_i32 = arith.constant 0 : i32
    %c0_i32_0 = arith.constant 0 : i32
    %c0_i32_1 = arith.constant 0 : i32
    return %c0_i32, %c0_i32_0 : i32, i32
  }
  func.func @transform_2(%arg0: i32) -> (i32, i32) {
    %c0_i32 = arith.constant 0 : i32
    %c0_i32_0 = arith.constant 0 : i32
    %c0_i32_1 = arith.constant 0 : i32
    return %c0_i32, %c0_i32_0 : i32, i32
  }
}

</mosaic_0001>

<llo_original>
// kernel: tpu_custom_call.1
$region0: #{tpu_custom_call.1}
  #allocation0 [shape = 'u32[]', space=smem, size = 0x4, offset = 0x4, fixed_abs, tag = 'smem constant byte address 0x4 - core index']
  #allocation1 [shape = 'u32[72,128]{1,0:T(1,128)}', space=vmem, size = 0x9000, scoped, tag = 'internal scratch']
  %s0 = inlined_call_operand.vmem [shape: s32[16,1], index: 0, kind: input, shape index: {}]
  %s1 = inlined_call_operand.vmem [shape: f32[128,32], index: 1, kind: input, shape index: {}]
  %s2 = inlined_call_operand.hbm [shape: f32[16,32], index: 2, kind: output, shape index: {}]
  %s3 = sld [smem:[#allocation0]]
  $region18: #{tpu_custom_call.1} parent=0
    _
  %s5 = ssub.s32 1, %s3
  %s6 = scalar_select 0, %s5, %s3
  $region1: #{tpu_custom_call.1} parent=0
    #allocation2 [shape = 'u8[8192]{0}', space=vmem, size = 0x2000, scoped, tag = 'output window, operand 0, single buffered']
    #allocation3 [shape = 's32[1]{0}', space=sflag, size = 0x4, scoped, tag = 'scoped memory for tpu_custom_call.1']
    %7 = vsyncpa [#allocation3], 0
    // Predicated region
    $region2: #{tpu_custom_call.1} parent=1 // pred_check
      _
    $region3: #{tpu_custom_call.1} parent=1 // pred_check_branch
      %9 = sbr.rel (0) target = $region5
    $region4: #{tpu_custom_call.1} parent=1 // pred_region
      _
    $region5: #{tpu_custom_call.1} parent=1 // pred_fallthru
      _
    // Predicated region
    $region6: #{tpu_custom_call.1} parent=1 // pred_check
      _
    $region7: #{tpu_custom_call.1} parent=1 // pred_check_branch
      %11 = sbr.rel (0) target = $region9
    $region8: #{tpu_custom_call.1} parent=1 // pred_region
      _
    $region9: #{tpu_custom_call.1} parent=1 // pred_fallthru
      _
    %v12 = vld [vmem:[%s0] sm:$0xff]
    %v13 = vld [vmem:[%s0 + $0x8] sm:$0xff]
    %v14 = vlaneseq
    %v15 = vshrl.u32 %v14, 7
    %v16 = vadd.s32 %v15, 8
    %v17 = vand.u32 %v15, 7
    %v18 = vand.u32 %v16, 7
    %v19 = vadd.s32 %v17, 64
    %v20 = vadd.s32 %v18, 64
    %v21 = vlaneseq
    %v22 = vand.u32 %v21, 127
    %23 = vset.pattern.permute.xlu0 0
    %24 = vperm.xlu0 %23, %v12
    %v25 = vpop.permute.xlu0 %24
    %26 = vset.pattern.permute.xlu0 0
    %27 = vperm.xlu0 %26, %v13
    %v28 = vpop.permute.xlu0 %27
    %vm29 = vcmp.eq.s32.totalorder %v22, %v25
    %vm30 = vcmp.eq.s32.totalorder %v22, %v28
    %vm31 = vcmp.eq.s32.totalorder %v22, %v19
    %vm32 = vcmp.eq.s32.totalorder %v22, %v20
    %vm33 = vmor %vm29, %vm31
    %vm34 = vmor %vm30, %vm32
    %v35 = vsel %vm33, 1, 0
    %v36 = vsel %vm34, 1, 0
    %v37 = vcvt.s32.f32 %v35
    %v38 = vcvt.s32.f32 %v36
    %v39 = vld [vmem:[%s1] sm:$0xff]
    %v40 = vld [vmem:[%s1 + $0x8] sm:$0xff]
    %v41 = vld [vmem:[%s1 + $0x10] sm:$0xff]
    %v42 = vld [vmem:[%s1 + $0x18] sm:$0xff]
    %v43 = vld [vmem:[%s1 + $0x20] sm:$0xff]
    %v44 = vld [vmem:[%s1 + $0x28] sm:$0xff]
    %v45 = vld [vmem:[%s1 + $0x30] sm:$0xff]
    %v46 = vld [vmem:[%s1 + $0x38] sm:$0xff]
    %v47 = vld [vmem:[%s1 + $0x40] sm:$0xff]
    %v48 = vld [vmem:[%s1 + $0x48] sm:$0xff]
    %v49 = vld [vmem:[%s1 + $0x50] sm:$0xff]
    %v50 = vld [vmem:[%s1 + $0x58] sm:$0xff]
    %v51 = vld [vmem:[%s1 + $0x60] sm:$0xff]
    %v52 = vld [vmem:[%s1 + $0x68] sm:$0xff]
    %v53 = vld [vmem:[%s1 + $0x70] sm:$0xff]
    %v54 = vld [vmem:[%s1 + $0x78] sm:$0xff]
    %55 = vmatpush.msra.mxu0 %v54
    %56 = vmatpush.msra.mxu0 %v53
    %57 = vmatpush.msra.mxu0 %v52
    %58 = vmatpush.msra.mxu0 %v51
    %59 = vmatpush.msra.mxu0 %v50
    %60 = vmatpush.msra.mxu0 %v49
    %61 = vmatpush.msra.mxu0 %v48
    %62 = vmatpush.msra.mxu0 %v47
    %63 = vmatpush.msra.mxu0 %v46
    %64 = vmatpush.msra.mxu0 %v45
    %65 = vmatpush.msra.mxu0 %v44
    %66 = vmatpush.msra.mxu0 %v43
    %67 = vmatpush.msra.mxu0 %v42
    %68 = vmatpush.msra.mxu0 %v41
    %69 = vmatpush.msra.mxu0 %v40
    %70 = vmatpush.msra.mxu0 %v39
    %71 = vmatmul.f32.gmra.mxu0 %v37
    %v72 = vpop.f32.mrf.mxu0
    %v73 = vadd.f32 0.0, %v72
    %74 = vmatmul.f32.gmra.mxu0 %v38
    %v75 = vpop.f32.mrf.mxu0
    %v76 = vadd.f32 0.0, %v75
    %77 = vdwg.mxu0
    %vm78 = vcmask 261120
    %v79 = vsel %vm78, %v73, 0.0
    %80 = vadd.xlane.f32.xlu0 %v79
    %v81 = vpop.xlane.xlu0 %80
    %v82 = vsel %vm78, %v76, 0.0
    %83 = vadd.xlane.f32.xlu0 %v82
    %v84 = vpop.xlane.xlu0 %83
    %v85 = vrcp.pop 32.0
    %v86 = vmul.f32 32.0, %v85
    %v87 = vsub.f32 1.0, %v86
    %v88 = vmul.f32 %v85, %v87
    %v89 = vadd.f32 %v85, %v88
    %vm90 = vweird.f32 %v85
    %v91 = vsel %vm90, %v85, %v89
    %v92 = vmul.f32 %v81, %v91
    %v93 = vmul.f32 %v84, %v91
    %v94 = vmul.f32 %v73, %v73
    %v95 = vmul.f32 %v76, %v76
    %v96 = vsel %vm78, %v94, 0.0
    %97 = vadd.xlane.f32.xlu0 %v96
    %v98 = vpop.xlane.xlu0 %97
    %v99 = vsel %vm78, %v95, 0.0
    %100 = vadd.xlane.f32.xlu0 %v99
    %v101 = vpop.xlane.xlu0 %100
    %v102 = vmul.f32 %v98, %v91
    %v103 = vmul.f32 %v101, %v91
    %v104 = vmul.f32 %v92, %v92
    %v105 = vmul.f32 %v93, %v93
    %v106 = vsub.f32 %v102, %v104
    %v107 = vsub.f32 %v103, %v105
    %v108 = vsub.f32 %v73, %v92
    %v109 = vsub.f32 %v76, %v93
    %v110 = vadd.f32 %v106, 1e-12
    %v111 = vadd.f32 %v107, 1e-12
    %v112 = vrsqrt.pop %v110
    %v113 = vmul.f32 %v112, %v110
    %v114 = vmul.f32 %v113, %v112
    %v115 = vmul.f32 0.5, %v114
    %v116 = vsub.f32 1.5, %v115
    %v117 = vmul.f32 %v112, %v116
    %vm118 = vweird.f32 %v110
    %vm119 = vweird.f32 %v112
    %vm120 = vmor %vm118, %vm119
    %v121 = vsel %vm120, %v112, %v117
    %v122 = vrsqrt.pop %v111
    %v123 = vmul.f32 %v122, %v111
    %v124 = vmul.f32 %v123, %v122
    %v125 = vmul.f32 0.5, %v124
    %v126 = vsub.f32 1.5, %v125
    %v127 = vmul.f32 %v122, %v126
    %vm128 = vweird.f32 %v111
    %vm129 = vweird.f32 %v122
    %vm130 = vmor %vm128, %vm129
    %v131 = vsel %vm130, %v122, %v127
    %v132 = vmul.f32 %v108, %v121
    %v133 = vmul.f32 %v109, %v131
    %v134 = vld [vmem:[%s1 + $0x50] sm:$0x1]
    %v135 = vld [vmem:[%s1 + $0x51] sm:$0x1]
    %v136 = vperm.slane %v134, 0
    %v137 = vmul.f32 %v136, %v132
    %v138 = vmul.f32 %v136, %v133
    %v139 = vperm.slane %v135, 0
    %v140 = vadd.f32 %v137, %v139
    %v141 = vadd.f32 %v138, %v139
    %142 = vst.msk [vmem:[#allocation2] sm:$0xff] %vm78, %v140
    %143 = vst.msk [vmem:[#allocation2 + $0x8] sm:$0xff] %vm78, %v141
    // Predicated region
    $region10: #{tpu_custom_call.1} parent=1 // pred_check
      _
    $region11: #{tpu_custom_call.1} parent=1 // pred_check_branch
      %145 = sbr.rel (0) target = $region13
    $region12: #{tpu_custom_call.1} parent=1 // pred_region
      %147 = vsyncadd [#allocation3], 0
      %s148 = sshll.u32 [#allocation2], 4
      %s149 = int_to_ptr.vmem [resolvable:$true] %s148
      %s150 = sshll.u32 %s2, 4
      %s151 = int_to_ptr.hbm [resolvable:$true] %s150
      %156 = dma.vmem_to_hbm [thread:$0]  %s149, 256, %s151, [#allocation3], 128, 128, 8
    $region13: #{tpu_custom_call.1} parent=1 // pred_fallthru
      _
    // Predicated region
    $region14: #{tpu_custom_call.1} parent=1 // pred_check
      _
    $region15: #{tpu_custom_call.1} parent=1 // pred_check_branch
      %158 = sbr.rel (0) target = $region17
    $region16: #{tpu_custom_call.1} parent=1 // pred_region
      %160 = dma.done [#allocation3], 256
    $region17: #{tpu_custom_call.1} parent=1 // pred_fallthru
      _
    %161 = vsyncpa [#allocation3], 1

</llo_original>
